<compile_context>
chip_gen: v6e
topology: v6e:2x2x1
jax: 0.10.0
libtpu: 0.0.40
codegen_flags: <defaults>
</compile_context>

<pallas_src>
import functools

import numpy as np

import jax
import jax.numpy as jnp
from jax.experimental import pallas as pl
from jax.experimental.pallas import tpu as pltpu


def _moving_avg_kernel(w_ref, x_ref, o_ref, *, batch_tile: int, precision):
    """One grid step: (TB, L, TC) input tile -> (TB, OUT, TC) pooled tile.

    w_ref: (OUT, L) averaging matrix (replicate padding + stride folded in);
           constant index_map keeps it VMEM-resident across the grid.
    x_ref: (TB, L, TC) input tile  (time on sublanes, channels on lanes).
    o_ref: (TB, OUT, TC) output tile.
    """
    w = w_ref[...]
    for i in range(batch_tile):          # static unroll; TB is kept small (<= 8)
        xi = x_ref[i]                    # (L, TC)
        if xi.dtype != w.dtype:
            xi = xi.astype(w.dtype)
        o_ref[i] = jax.lax.dot_general(  # MXU: windowed sum is free compute
            w, xi,
            dimension_numbers=(((1,), (0,)), ((), ())),
            preferred_element_type=jnp.float32,
            precision=precision,
        ).astype(o_ref.dtype)


def _build_avg_matrix(l: int, kernel_size: int, stride: int, pad: int, out_len: int):
    """Banded (out_len, L) matrix: out = W @ x == replicate-pad AvgPool1d."""
    # padded position -> source row under replicate padding
    src = np.clip(np.arange(l + 2 * pad) - pad, 0, l - 1)
    w = np.zeros((out_len, l), dtype=np.float64)
    rows = np.arange(out_len)
    for j in range(kernel_size):
        cols = src[rows * stride + j]
        np.add.at(w, (rows, cols), 1.0)       # edge windows hit a column repeatedly
    return w / float(kernel_size)


def _vmem_limit_bytes() -> int:
    """Generation-aware scoped-VMEM budget with a conservative fallback."""
    try:
        cap = int(pltpu.get_tpu_info().vmem_capacity_bytes)
    except Exception:
        cap = 64 * 1024 * 1024                # safe on every generation (v7x = 64 MiB)
    return max(32 * 1024 * 1024, min(3 * cap // 4, 100 * 1024 * 1024))


def moving_avg(x: jax.Array, kernel_size: int, stride: int) -> jax.Array:
    """Moving average over the time axis of x with shape (B, L, C)."""
    b, l, c = x.shape
    pad = (kernel_size - 1) // 2
    l_pad = l + 2 * pad
    assert l_pad >= kernel_size, "sequence too short for this kernel_size"
    out_len = (l_pad - kernel_size) // stride + 1     # AvgPool1d output length

    itemsize = jnp.dtype(x.dtype).itemsize
    vmem_limit = _vmem_limit_bytes()

    # ---- averaging matrix (stride + replicate padding baked into its rows) ----
    if x.dtype == jnp.bfloat16:
        w_dtype, precision = jnp.bfloat16, jax.lax.Precision.DEFAULT   # native MXU bf16
    else:
        w_dtype, precision = jnp.float32, jax.lax.Precision.HIGHEST    # fp32 contraction
    w = jnp.asarray(_build_avg_matrix(l, kernel_size, stride, pad, out_len), dtype=w_dtype)
    # TODO(synk): for very long sequences (L in the many thousands) switch to a
    # time-tiled banded matmul (halo of kernel_size-1 rows) or a cumsum-difference
    # formulation so W stays O(L*k) instead of a dense (out_len, L) block.

    # ---- channel tile: lane-dense when possible, else full-C extent ----------
    if c % 128 != 0:
        tc = c                                # block dim == array dim: no pad/post-slice
    else:
        tc = 128
        for cand in (512, 384, 256, 128):
            if c % cand != 0:
                continue
            blk = (2 * itemsize + 4) * (l + out_len) * cand   # dbl-buffered io + f32 work
            if blk <= vmem_limit // 3:
                tc = cand
                break
    num_c_blocks = c // tc

    # ---- batch tile: a few MiB per block, >=2 grid steps when possible -------
    per_b = (2 * itemsize + 4) * (l + out_len) * tc
    max_block = min(8 << 20, vmem_limit // 3)
    tb = 1
    for cand in range(min(b, 8), 0, -1):
        if b % cand == 0 and cand * per_b <= max_block:
            tb = cand
            break
    if (b // tb) * num_c_blocks < 2 and tb > 1:       # keep both v7x cores busy
        for cand in range(tb // 2, 0, -1):
            if b % cand == 0:
                tb = cand
                break
    grid = (b // tb, num_c_blocks)

    kernel = functools.partial(_moving_avg_kernel, batch_tile=tb, precision=precision)

    flops = 2 * b * out_len * l * c
    bytes_accessed = (b * l * c + b * out_len * c) * itemsize + w.size * w.dtype.itemsize

    return pl.pallas_call(
        kernel,
        out_shape=jax.ShapeDtypeStruct((b, out_len, c), x.dtype),
        grid_spec=pltpu.PrefetchScalarGridSpec(
            num_scalar_prefetch=0,
            grid=grid,
            in_specs=[
                pl.BlockSpec((out_len, l), lambda ib, ic: (0, 0)),       # W: VMEM-resident
                pl.BlockSpec((tb, l, tc), lambda ib, ic: (ib, 0, ic)),   # x tile
            ],
            out_specs=pl.BlockSpec((tb, out_len, tc), lambda ib, ic: (ib, 0, ic)),
        ),
        compiler_params=pltpu.CompilerParams(
            dimension_semantics=("parallel", "parallel"),
            vmem_limit_bytes=vmem_limit,
        ),
        cost_estimate=pl.CostEstimate(
            flops=int(flops), transcendentals=0, bytes_accessed=int(bytes_accessed)),
    )(w, x)


def moving_avg_reference(x: jax.Array, kernel_size: int, stride: int) -> jax.Array:
    """Pure-JAX reference mirroring the PyTorch forward."""
    b, l, c = x.shape
    pad = (kernel_size - 1) // 2
    front = jnp.broadcast_to(x[:, 0:1, :], (b, pad, c))
    end = jnp.broadcast_to(x[:, -1:, :], (b, pad, c))
    x_pad = jnp.concatenate([front, x, end], axis=1)
    l_pad = l + 2 * pad
    out_len = (l_pad - kernel_size) // stride + 1
    windows = jnp.stack(
        [x_pad[:, t * stride: t * stride + kernel_size, :] for t in range(out_len)],
        axis=1,
    )  # (B, out_len, k, C)
    return jnp.mean(windows.astype(jnp.float32), axis=2).astype(x.dtype)


if __name__ == "__main__":
    key = jax.random.PRNGKey(0)
    key1, key2 = jax.random.split(key)

    # Primary config (DLinear-style): odd kernel, stride 1, lane-dense C.
    B, L, C = 2, 8, 128
    kernel_size, stride = 5, 1
    x = jax.random.normal(key1, (B, L, C), dtype=jnp.float32)
    out = jax.block_until_ready(moving_avg(x, kernel_size, stride))
    ref = moving_avg_reference(x, kernel_size, stride)
    assert out.shape == ref.shape, (out.shape, ref.shape)
    assert jnp.allclose(out, ref, atol=1e-5, rtol=1e-5), "mismatch vs reference (test 1)"

    # Secondary config: even kernel, stride > 1, C not a multiple of 128
    # (full-C channel block, strided rows baked into W).
    B2, L2, C2 = 3, 16, 96
    k2, s2 = 4, 2
    x2 = jax.random.normal(key2, (B2, L2, C2), dtype=jnp.float32)
    out2 = jax.block_until_ready(moving_avg(x2, k2, s2))
    ref2 = moving_avg_reference(x2, k2, s2)
    assert out2.shape == ref2.shape, (out2.shape, ref2.shape)
    assert jnp.allclose(out2, ref2, atol=1e-5, rtol=1e-5), "mismatch vs reference (test 2)"

    print("KERNEL_OK")
</pallas_src>

<mosaic_0001>
module attributes {stable_mosaic.version = 11 : i64} {
  func.func @_moving_avg_kernel(%arg0: i32, %arg1: i32, %arg2: memref<8x8xf32, #tpu.memory_space<vmem>>, %arg3: memref<1x8x128xf32, #tpu.memory_space<vmem>>, %arg4: memref<1x8x128xf32, #tpu.memory_space<vmem>>) attributes {dimension_semantics = [#tpu.dimension_semantics<parallel>, #tpu.dimension_semantics<parallel>], iteration_bounds = array<i64: 2, 1>, scalar_prefetch = 0 : i64, scratch_operands = 0 : i64, tpu.core_type = #tpu.core_type<tc>, window_params = [{pipeline_mode = #tpu.pipeline_mode<synchronous>, transform_indices = @transform_0, window_bounds = array<i64: 8, 8>}, {transform_indices = @transform_1, window_bounds = array<i64: 1, 8, 128>}, {transform_indices = @transform_2, window_bounds = array<i64: 1, 8, 128>}]} {
    %c0 = arith.constant 0 : index
    %c0_0 = arith.constant 0 : index
    %0 = vector.load %arg2[%c0, %c0_0] : memref<8x8xf32, #tpu.memory_space<vmem>>, vector<8x8xf32>
    %c0_1 = arith.constant 0 : index
    %c0_2 = arith.constant 0 : index
    %c0_3 = arith.constant 0 : index
    %1 = vector.load %arg3[%c0_1, %c0_2, %c0_3] : memref<1x8x128xf32, #tpu.memory_space<vmem>>, vector<1x8x128xf32>
    %2 = vector.shape_cast %1 : vector<1x8x128xf32> to vector<8x128xf32>
    %cst = arith.constant dense<0.000000e+00> : vector<8x128xf32>
    %3 = tpu.matmul %0, %2, %cst {dimension_numbers = #tpu.dot_dimension_numbers<[1], [0], [0], [1], [0, 0, 1, 1], [], []>, precision = #tpu.contract_precision<fp32>} : vector<8x8xf32>, vector<8x128xf32>, vector<8x128xf32> -> vector<8x128xf32>
    %c0_4 = arith.constant 0 : index
    %c0_5 = arith.constant 0 : index
    %c0_6 = arith.constant 0 : index
    %4 = vector.load %arg4[%c0_4, %c0_5, %c0_6] : memref<1x8x128xf32, #tpu.memory_space<vmem>>, vector<1x8x128xf32>
    %5 = vector.shape_cast %4 : vector<1x8x128xf32> to vector<8x128xf32>
    %6 = vector.shape_cast %3 : vector<8x128xf32> to vector<1x8x128xf32>
    tpu.vector_store %arg4[%c0_4, %c0_5, %c0_6], %6 {strides = array<i32>} : memref<1x8x128xf32, #tpu.memory_space<vmem>>, vector<1x8x128xf32>,
    return
  }
  func.func @transform_0(%arg0: i32, %arg1: i32) -> (i32, i32) {
    %c0_i32 = arith.constant 0 : i32
    %c0_i32_0 = arith.constant 0 : i32
    %c0_i32_1 = arith.constant 0 : i32
    return %c0_i32, %c0_i32_0 : i32, i32
  }
  func.func @transform_1(%arg0: i32, %arg1: i32) -> (i32, i32, i32) {
    %c0_i32 = arith.constant 0 : i32
    %c0_i32_0 = arith.constant 0 : i32
    return %arg0, %c0_i32, %arg1 : i32, i32, i32
  }
  func.func @transform_2(%arg0: i32, %arg1: i32) -> (i32, i32, i32) {
    %c0_i32 = arith.constant 0 : i32
    %c0_i32_0 = arith.constant 0 : i32
    return %arg0, %c0_i32, %arg1 : i32, i32, i32
  }
}

</mosaic_0001>

<llo_original>
// kernel: tpu_custom_call.1
$region0: #{tpu_custom_call.1}
  #allocation0 [shape = 'u32[]', space=smem, size = 0x4, offset = 0x4, fixed_abs, tag = 'smem constant byte address 0x4 - core index']
  #allocation1 [shape = 'u32[144,128]{1,0:T(1,128)}', space=vmem, size = 0x12000, scoped, tag = 'internal scratch']
  %s0 = inlined_call_operand.hbm [shape: f32[8,8], index: 0, kind: input, shape index: {}]
  %s1 = inlined_call_operand.hbm [shape: f32[2,8,128], index: 1, kind: input, shape index: {}]
  %s2 = inlined_call_operand.hbm [shape: f32[2,8,128], index: 2, kind: output, shape index: {}]
  %s3 = sld [smem:[#allocation0]]
  $region49: #{tpu_custom_call.1} parent=0
    _
  %s5 = ssub.s32 1, %s3
  %s6 = scalar_select 0, %s5, %s3
  $region1: #{tpu_custom_call.1} parent=0
    #allocation2 [shape = 'u8[4096]{0}', space=vmem, size = 0x1000, scoped, tag = 'input window, operand 0, single buffered']
    #allocation3 [shape = 's32[2]{0}', space=sflag, size = 0x8, scoped, tag = 'scoped memory for tpu_custom_call.1']
    #allocation4 [shape = 's32[2]{0}', space=sflag, size = 0x8, scoped, tag = 'scoped memory for tpu_custom_call.1']
    #allocation5 [shape = 'u8[8192]{0}', space=vmem, size = 0x2000, scoped, tag = 'input window, operand 1']
    #allocation6 [shape = 's32[2]{0}', space=sflag, size = 0x8, scoped, tag = 'scoped memory for tpu_custom_call.1']
    #allocation7 [shape = 'u8[8192]{0}', space=vmem, size = 0x2000, scoped, tag = 'output window, operand 0']
    %7 = vsyncpa [#allocation3], 0
    %8 = vsyncpa [#allocation6], 0
    %s9 = scalar_lea.sflag [#allocation6], 1
    %10 = vsyncpa %s9, 0
    %11 = vsyncpa [#allocation4], 0
    %s12 = scalar_lea.sflag [#allocation4], 1
    %13 = vsyncpa %s12, 0
    loop: start=0, step=1, limit=4
    $region2: #{tpu_custom_call.1} parent=1 // loop_pre_header
      _
    $region3: #{tpu_custom_call.1} parent=1 // loop_header
      %s15 = sphi 0, %s19
      %p16 = scmp.ge.s32.totalorder %s15, 4
      %s22 = sphi 0, %s34
      %s23 = sphi 0, %s30
      %s24 = sphi 0, %s22
      %s25 = sphi 0, %s23
      %s26 = sphi 0, %s24
      %s27 = sphi 0, %s25
      %s35 = sphi 0, %s35
      %s37 = sphi 0, %s35
      %s38 = sphi 0, %s37
      %s52 = sphi 0, %s38
      %s60 = sphi 0, %s62
      %s63 = sphi 0, %s60
      %s64 = sphi 0, %s63
      %s80 = sphi 0, %s64
      %s88 = sphi 0, %s90
      %s91 = sphi 0, %s88
      %s92 = sphi 0, %s91
      %s108 = sphi 0, %s92
    $region4: #{tpu_custom_call.1} parent=1 // loop_header_branch
      %18 = sbr.rel (%p16) target = $region8
    $region5: #{tpu_custom_call.1} parent=1 // loop_body
      %s20 = ssub.s32 %s15, 1
      %s21 = ssub.s32 %s15, 2
      %s28 = sadd.s32 1, %s23
      %p29 = scmp.ge.s32.totalorder %s28, 1
      %s30 = scalar_select %p29, 0, %s28
      %s31 = sadd.s32 1, %s22
      %s32 = scalar_select %p29, %s31, %s22
      %p33 = scmp.ge.s32.totalorder %s32, 2
      %s34 = scalar_select %p33, 0, %s32
      %s36 = sadd.s32 %s35, 1
      %p39 = scmp.eq.s32.totalorder %s15, 1
      %p40 = scmp.ne.s32.totalorder %s35, %s37
      %p41 = scmp.eq.s32.totalorder %s15, 0
      %p42 = por %p40, %p41
      %p43 = scmp.ne.s32.totalorder %s35, %s37
      %p44 = scmp.eq.s32.totalorder %s20, 1
      %p45 = por %p43, %p44
      %p46 = scmp.ne.s32.totalorder %s37, %s38
      %p47 = scmp.eq.s32.totalorder %s20, 0
      %p48 = por %p46, %p47
      %p49 = scmp.ne.s32.totalorder %s37, %s38
      %p50 = scmp.eq.s32.totalorder %s21, 1
      %p51 = por %p49, %p50
      %p53 = scmp.ne.s32.totalorder %s38, %s52
      %p54 = scmp.eq.s32.totalorder %s21, 0
      %p55 = por %p53, %p54
      %s56 = ssub.s32 %s22, %s34
      %s57 = ssub.s32 %s23, %s30
      %s58 = sor.u32 %s56, %s57
      %p59 = scmp.eq.s32.totalorder %s58, 0
      %s61 = sadd.s32 %s60, 1
      %s62 = scalar_select %p59, %s60, %s61
      %p65 = pneg %p59
      %p66 = scmp.eq.s32.totalorder %s15, 1
      %p67 = por %p65, %p66
      %p68 = scmp.ne.s32.totalorder %s60, %s63
      %p69 = scmp.eq.s32.totalorder %s15, 0
      %p70 = por %p68, %p69
      %p71 = scmp.ne.s32.totalorder %s60, %s63
      %p72 = scmp.eq.s32.totalorder %s20, 1
      %p73 = por %p71, %p72
      %p74 = scmp.ne.s32.totalorder %s63, %s64
      %p75 = scmp.eq.s32.totalorder %s20, 0
      %p76 = por %p74, %p75
      %p77 = scmp.ne.s32.totalorder %s63, %s64
      %p78 = scmp.eq.s32.totalorder %s21, 1
      %p79 = por %p77, %p78
      %p81 = scmp.ne.s32.totalorder %s64, %s80
      %p82 = scmp.eq.s32.totalorder %s21, 0
      %p83 = por %p81, %p82
      %s84 = ssub.s32 %s22, %s34
      %s85 = ssub.s32 %s23, %s30
      %s86 = sor.u32 %s84, %s85
      %p87 = scmp.eq.s32.totalorder %s86, 0
      %s89 = sadd.s32 %s88, 1
      %s90 = scalar_select %p87, %s88, %s89
      %p93 = pneg %p87
      %p94 = scmp.eq.s32.totalorder %s15, 1
      %p95 = por %p93, %p94
      %p96 = scmp.ne.s32.totalorder %s88, %s91
      %p97 = scmp.eq.s32.totalorder %s15, 0
      %p98 = por %p96, %p97
      %p99 = scmp.ne.s32.totalorder %s88, %s91
      %p100 = scmp.eq.s32.totalorder %s20, 1
      %p101 = por %p99, %p100
      %p102 = scmp.ne.s32.totalorder %s91, %s92
      %p103 = scmp.eq.s32.totalorder %s20, 0
      %p104 = por %p102, %p103
      %p105 = scmp.ne.s32.totalorder %s91, %s92
      %p106 = scmp.eq.s32.totalorder %s21, 1
      %p107 = por %p105, %p106
      %p109 = scmp.ne.s32.totalorder %s92, %s108
      %p110 = scmp.eq.s32.totalorder %s21, 0
      %p111 = por %p109, %p110
      %p112 = scmp.le.s32.totalorder 1, %s15
      %p113 = scmp.lt.s32.totalorder %s15, 3
      %p114 = pnand %p112, %p113
      %p115 = pneg %p114
      // Predicated region
      $region9: #{tpu_custom_call.1} parent=5 // pred_check
        _
      $region10: #{tpu_custom_call.1} parent=5 // pred_check_branch
        %117 = sbr.rel (%p114) target = $region12
      $region11: #{tpu_custom_call.1} parent=5 // pred_region
        %s118 = ssub.s32 %s15, 1
        // Predicated region
        $region13: #{tpu_custom_call.1} parent=11 // pred_check
          %p119 = pneg %p48
        $region14: #{tpu_custom_call.1} parent=11 // pred_check_branch
          %121 = sbr.rel (%p119) target = $region16
        $region15: #{tpu_custom_call.1} parent=11 // pred_region
          %s123 = ssub.s32 128, 128
          %124 = vsyncadd [#allocation3], %s123
          %s126 = sshll.u32 [#allocation2], 4
          %s127 = int_to_ptr.vmem [resolvable:$true] %s126
          %129 = dma.hbm_to_vmem [thread:$0]  %s0, 128, %s127, [#allocation3]
        $region16: #{tpu_custom_call.1} parent=11 // pred_fallthru
          _
      $region12: #{tpu_custom_call.1} parent=5 // pred_fallthru
        _
      %p130 = scmp.lt.s32.totalorder %s15, 2
      // Predicated region
      $region17: #{tpu_custom_call.1} parent=5 // pred_check
        %p131 = pneg %p130
      $region18: #{tpu_custom_call.1} parent=5 // pred_check_branch
        %133 = sbr.rel (%p131) target = $region20
      $region19: #{tpu_custom_call.1} parent=5 // pred_region
        // Predicated region
        $region21: #{tpu_custom_call.1} parent=19 // pred_check
          %p134 = pneg %p70
        $region22: #{tpu_custom_call.1} parent=19 // pred_check_branch
          %136 = sbr.rel (%p134) target = $region24
        $region23: #{tpu_custom_call.1} parent=19 // pred_region
          %s137 = sand.u32 %s60, 1
          %s138 = scalar_lea.sflag [#allocation6], %s137
          %s139 = sand.u32 %s60, 1
          %s140 = smul.addr %s139, 8
          %s141 = scalar_lea.vmem [#allocation5], %s140
          %s143 = ssub.s32 128, 128
          %144 = vsyncadd %s138, %s143
          %s145 = sadd.s32 %s23, %s22
          %s146 = smul.addr %s145, 128
          %s147 = scalar_lea.hbm %s1, %s146
          %s149 = sshll.u32 %s141, 4
          %s150 = int_to_ptr.vmem [resolvable:$true] %s149
          %152 = dma.hbm_to_vmem [thread:$0]  %s147, 128, %s150, %s138
        $region24: #{tpu_custom_call.1} parent=19 // pred_fallthru
          _
      $region20: #{tpu_custom_call.1} parent=5 // pred_fallthru
        _
      %p153 = scmp.le.s32.totalorder 1, %s15
      %p154 = scmp.lt.s32.totalorder %s15, 3
      %p155 = pnand %p153, %p154
      %p156 = pneg %p155
      // Predicated region
      $region25: #{tpu_custom_call.1} parent=5 // pred_check
        _
      $region26: #{tpu_custom_call.1} parent=5 // pred_check_branch
        %158 = sbr.rel (%p155) target = $region28
      $region27: #{tpu_custom_call.1} parent=5 // pred_region
        %s159 = ssub.s32 %s15, 1
        // Predicated region
        $region29: #{tpu_custom_call.1} parent=27 // pred_check
          %p160 = pneg %p48
        $region30: #{tpu_custom_call.1} parent=27 // pred_check_branch
          %162 = sbr.rel (%p160) target = $region32
        $region31: #{tpu_custom_call.1} parent=27 // pred_region
          %163 = dma.done [#allocation3], 128
        $region32: #{tpu_custom_call.1} parent=27 // pred_fallthru
          _
        %s164 = sand.u32 %s63, 1
        %s165 = scalar_lea.sflag [#allocation6], %s164
        %s166 = sand.u32 %s63, 1
        %s167 = smul.addr %s166, 8
        %s168 = scalar_lea.vmem [#allocation5], %s167
        // Predicated region
        $region33: #{tpu_custom_call.1} parent=27 // pred_check
          %p169 = pneg %p76
        $region34: #{tpu_custom_call.1} parent=27 // pred_check_branch
          %171 = sbr.rel (%p169) target = $region36
        $region35: #{tpu_custom_call.1} parent=27 // pred_region
          %172 = dma.done %s165, 128
        $region36: #{tpu_custom_call.1} parent=27 // pred_fallthru
          _
        %p173 = pneg %p48
        %p174 = pneg %p45
        %s175 = sand.u32 %s63, 1
        %s176 = scalar_lea.sflag [#allocation6], %s175
        %s177 = sand.u32 %s63, 1
        %s178 = smul.addr %s177, 8
        %s179 = scalar_lea.vmem [#allocation5], %s178
        %p180 = pneg %p76
        %p181 = pneg %p73
        %p182 = pneg %p104
        %p183 = pneg %p101
        %s184 = sand.u32 %s91, 1
        %s185 = scalar_lea.sflag [#allocation4], %s184
        %s186 = sand.u32 %s91, 1
        %s187 = smul.addr %s186, 8
        %s188 = scalar_lea.vmem [#allocation7], %s187
        %v189 = vld [vmem:[#allocation2] sm:$0xff]
        %v190 = vld [vmem:[%s168] sm:$0xff]
        %vm191 = vcmask 64512
        %v193 = vsel %vm191, %v189, 0
        %195 = vmatprep.subr.mxu0 0.0
        %196 = vmatpush1.msra.mxu0 0.0
        %197 = vmatprep.subr.mxu0 0.0
        %198 = vmatpush1.msra.mxu0 0.0
        %199 = vmatprep.subr.mxu0 0.0
        %200 = vmatpush1.msra.mxu0 0.0
        %201 = vmatprep.subr.mxu0 0.0
        %202 = vmatpush1.msra.mxu0 0.0
        %203 = vmatprep.subr.mxu0 0.0
        %204 = vmatpush1.msra.mxu0 0.0
        %205 = vmatprep.subr.mxu0 0.0
        %206 = vmatpush1.msra.mxu0 0.0
        %207 = vmatprep.subr.mxu0 0.0
        %208 = vmatpush1.msra.mxu0 0.0
        %209 = vmatprep.subr.mxu0 0.0
        %210 = vmatpush1.msra.mxu0 0.0
        %211 = vmatprep.subr.mxu0 0.0
        %212 = vmatpush1.msra.mxu0 0.0
        %213 = vmatprep.subr.mxu0 0.0
        %214 = vmatpush1.msra.mxu0 0.0
        %215 = vmatprep.subr.mxu0 0.0
        %216 = vmatpush1.msra.mxu0 0.0
        %217 = vmatprep.subr.mxu0 0.0
        %218 = vmatpush1.msra.mxu0 0.0
        %219 = vmatprep.subr.mxu0 0.0
        %220 = vmatpush1.msra.mxu0 0.0
        %221 = vmatprep.subr.mxu0 0.0
        %222 = vmatpush1.msra.mxu0 0.0
        %223 = vmatprep.subr.mxu0 0.0
        %224 = vmatpush1.msra.mxu0 0.0
        %225 = vmatprep.subr.mxu0 0.0
        %v226 = vand.u32 %v190, 4294901760
        %227 = vmatpush1.msra.mxu0 %v226
        %228 = vmatprep.subr.mxu0 0.0
        %229 = vmatpush2.msra.mxu0 0.0
        %230 = vmatprep.subr.mxu0 0.0
        %231 = vmatpush2.msra.mxu0 0.0
        %232 = vmatprep.subr.mxu0 0.0
        %233 = vmatpush2.msra.mxu0 0.0
        %234 = vmatprep.subr.mxu0 0.0
        %235 = vmatpush2.msra.mxu0 0.0
        %236 = vmatprep.subr.mxu0 0.0
        %237 = vmatpush2.msra.mxu0 0.0
        %238 = vmatprep.subr.mxu0 0.0
        %239 = vmatpush2.msra.mxu0 0.0
        %240 = vmatprep.subr.mxu0 0.0
        %241 = vmatpush2.msra.mxu0 0.0
        %242 = vmatprep.subr.mxu0 0.0
        %243 = vmatpush2.msra.mxu0 0.0
        %244 = vmatprep.subr.mxu0 0.0
        %245 = vmatpush2.msra.mxu0 0.0
        %246 = vmatprep.subr.mxu0 0.0
        %247 = vmatpush2.msra.mxu0 0.0
        %248 = vmatprep.subr.mxu0 0.0
        %249 = vmatpush2.msra.mxu0 0.0
        %250 = vmatprep.subr.mxu0 0.0
        %251 = vmatpush2.msra.mxu0 0.0
        %252 = vmatprep.subr.mxu0 0.0
        %253 = vmatpush2.msra.mxu0 0.0
        %254 = vmatprep.subr.mxu0 0.0
        %255 = vmatpush2.msra.mxu0 0.0
        %256 = vmatprep.subr.mxu0 0.0
        %257 = vmatpush2.msra.mxu0 0.0
        %258 = vmatprep.subr.mxu0 0.0
        %259 = vmatpush2.msra.mxu0 0.0
        %260 = vmatprep.mubr.f32.mxu0 0.0
        %v261 = vand.u32 %v193, 4294901760
        %v262 = vsub.f32 %v193, %v261
        %v263 = vand.u32 %v262, 4294901760
        %v264 = vsub.f32 %v262, %v263
        %v265 = vand.u32 %v264, 4294901760
        %266 = vmatmul.mubr.f32.gmra.mxu0 %v265
        %v267 = vpop.f32.mrf.mxu0
        %v268 = vadd.f32 0.0, %v267
        %v269 = vpop.f32.mrf.mxu0
        %270 = vdwg.mxu0
        %271 = vmatprep.subr.mxu0 0.0
        %272 = vmatpush1.msra.mxu0 0.0
        %273 = vmatprep.subr.mxu0 0.0
        %274 = vmatpush1.msra.mxu0 0.0
        %275 = vmatprep.subr.mxu0 0.0
        %276 = vmatpush1.msra.mxu0 0.0
        %277 = vmatprep.subr.mxu0 0.0
        %278 = vmatpush1.msra.mxu0 0.0
        %279 = vmatprep.subr.mxu0 0.0
        %280 = vmatpush1.msra.mxu0 0.0
        %281 = vmatprep.subr.mxu0 0.0
        %282 = vmatpush1.msra.mxu0 0.0
        %283 = vmatprep.subr.mxu0 0.0
        %284 = vmatpush1.msra.mxu0 0.0
        %285 = vmatprep.subr.mxu0 0.0
        %286 = vmatpush1.msra.mxu0 0.0
        %287 = vmatprep.subr.mxu0 0.0
        %288 = vmatpush1.msra.mxu0 0.0
        %289 = vmatprep.subr.mxu0 0.0
        %290 = vmatpush1.msra.mxu0 0.0
        %291 = vmatprep.subr.mxu0 0.0
        %292 = vmatpush1.msra.mxu0 0.0
        %293 = vmatprep.subr.mxu0 0.0
        %294 = vmatpush1.msra.mxu0 0.0
        %295 = vmatprep.subr.mxu0 0.0
        %296 = vmatpush1.msra.mxu0 0.0
        %297 = vmatprep.subr.mxu0 0.0
        %298 = vmatpush1.msra.mxu0 0.0
        %299 = vmatprep.subr.mxu0 0.0
        %300 = vmatpush1.msra.mxu0 0.0
        %301 = vmatprep.subr.mxu0 0.0
        %v302 = vand.u32 %v190, 4294901760
        %v303 = vsub.f32 %v190, %v302
        %v304 = vand.u32 %v303, 4294901760
        %v305 = vsub.f32 %v303, %v304
        %v306 = vand.u32 %v305, 4294901760
        %307 = vmatpush1.msra.mxu0 %v306
        %308 = vmatprep.subr.mxu0 0.0
        %309 = vmatpush2.msra.mxu0 0.0
        %310 = vmatprep.subr.mxu0 0.0
        %311 = vmatpush2.msra.mxu0 0.0
        %312 = vmatprep.subr.mxu0 0.0
        %313 = vmatpush2.msra.mxu0 0.0
        %314 = vmatprep.subr.mxu0 0.0
        %315 = vmatpush2.msra.mxu0 0.0
        %316 = vmatprep.subr.mxu0 0.0
        %317 = vmatpush2.msra.mxu0 0.0
        %318 = vmatprep.subr.mxu0 0.0
        %319 = vmatpush2.msra.mxu0 0.0
        %320 = vmatprep.subr.mxu0 0.0
        %321 = vmatpush2.msra.mxu0 0.0
        %322 = vmatprep.subr.mxu0 0.0
        %323 = vmatpush2.msra.mxu0 0.0
        %324 = vmatprep.subr.mxu0 0.0
        %325 = vmatpush2.msra.mxu0 0.0
        %326 = vmatprep.subr.mxu0 0.0
        %327 = vmatpush2.msra.mxu0 0.0
        %328 = vmatprep.subr.mxu0 0.0
        %329 = vmatpush2.msra.mxu0 0.0
        %330 = vmatprep.subr.mxu0 0.0
        %331 = vmatpush2.msra.mxu0 0.0
        %332 = vmatprep.subr.mxu0 0.0
        %333 = vmatpush2.msra.mxu0 0.0
        %334 = vmatprep.subr.mxu0 0.0
        %335 = vmatpush2.msra.mxu0 0.0
        %336 = vmatprep.subr.mxu0 0.0
        %337 = vmatpush2.msra.mxu0 0.0
        %338 = vmatprep.subr.mxu0 0.0
        %339 = vmatpush2.msra.mxu0 0.0
        %340 = vmatprep.mubr.f32.mxu0 0.0
        %v341 = vand.u32 %v193, 4294901760
        %342 = vmatmul.mubr.f32.gmra.mxu0 %v341
        %v343 = vpop.f32.mrf.mxu0
        %v344 = vadd.f32 %v268, %v343
        %v345 = vpop.f32.mrf.mxu0
        %346 = vdwg.mxu0
        %347 = vmatprep.subr.mxu0 0.0
        %348 = vmatpush1.msra.mxu0 0.0
        %349 = vmatprep.subr.mxu0 0.0
        %350 = vmatpush1.msra.mxu0 0.0
        %351 = vmatprep.subr.mxu0 0.0
        %352 = vmatpush1.msra.mxu0 0.0
        %353 = vmatprep.subr.mxu0 0.0
        %354 = vmatpush1.msra.mxu0 0.0
        %355 = vmatprep.subr.mxu0 0.0
        %356 = vmatpush1.msra.mxu0 0.0
        %357 = vmatprep.subr.mxu0 0.0
        %358 = vmatpush1.msra.mxu0 0.0
        %359 = vmatprep.subr.mxu0 0.0
        %360 = vmatpush1.msra.mxu0 0.0
        %361 = vmatprep.subr.mxu0 0.0
        %362 = vmatpush1.msra.mxu0 0.0
        %363 = vmatprep.subr.mxu0 0.0
        %364 = vmatpush1.msra.mxu0 0.0
        %365 = vmatprep.subr.mxu0 0.0
        %366 = vmatpush1.msra.mxu0 0.0
        %367 = vmatprep.subr.mxu0 0.0
        %368 = vmatpush1.msra.mxu0 0.0
        %369 = vmatprep.subr.mxu0 0.0
        %370 = vmatpush1.msra.mxu0 0.0
        %371 = vmatprep.subr.mxu0 0.0
        %372 = vmatpush1.msra.mxu0 0.0
        %373 = vmatprep.subr.mxu0 0.0
        %374 = vmatpush1.msra.mxu0 0.0
        %375 = vmatprep.subr.mxu0 0.0
        %376 = vmatpush1.msra.mxu0 0.0
        %377 = vmatprep.subr.mxu0 0.0
        %v378 = vand.u32 %v190, 4294901760
        %v379 = vsub.f32 %v190, %v378
        %380 = vmatpush1.msra.mxu0 %v379
        %381 = vmatprep.subr.mxu0 0.0
        %382 = vmatpush2.msra.mxu0 0.0
        %383 = vmatprep.subr.mxu0 0.0
        %384 = vmatpush2.msra.mxu0 0.0
        %385 = vmatprep.subr.mxu0 0.0
        %386 = vmatpush2.msra.mxu0 0.0
        %387 = vmatprep.subr.mxu0 0.0
        %388 = vmatpush2.msra.mxu0 0.0
        %389 = vmatprep.subr.mxu0 0.0
        %390 = vmatpush2.msra.mxu0 0.0
        %391 = vmatprep.subr.mxu0 0.0
        %392 = vmatpush2.msra.mxu0 0.0
        %393 = vmatprep.subr.mxu0 0.0
        %394 = vmatpush2.msra.mxu0 0.0
        %395 = vmatprep.subr.mxu0 0.0
        %396 = vmatpush2.msra.mxu0 0.0
        %397 = vmatprep.subr.mxu0 0.0
        %398 = vmatpush2.msra.mxu0 0.0
        %399 = vmatprep.subr.mxu0 0.0
        %400 = vmatpush2.msra.mxu0 0.0
        %401 = vmatprep.subr.mxu0 0.0
        %402 = vmatpush2.msra.mxu0 0.0
        %403 = vmatprep.subr.mxu0 0.0
        %404 = vmatpush2.msra.mxu0 0.0
        %405 = vmatprep.subr.mxu0 0.0
        %406 = vmatpush2.msra.mxu0 0.0
        %407 = vmatprep.subr.mxu0 0.0
        %408 = vmatpush2.msra.mxu0 0.0
        %409 = vmatprep.subr.mxu0 0.0
        %410 = vmatpush2.msra.mxu0 0.0
        %411 = vmatprep.subr.mxu0 0.0
        %412 = vmatpush2.msra.mxu0 0.0
        %413 = vmatprep.mubr.f32.mxu0 0.0
        %v414 = vand.u32 %v193, 4294901760
        %v415 = vsub.f32 %v193, %v414
        %416 = vmatmul.mubr.f32.gmra.mxu0 %v415
        %v417 = vpop.f32.mrf.mxu0
        %v418 = vadd.f32 %v344, %v417
        %v419 = vpop.f32.mrf.mxu0
        %420 = vdwg.mxu0
        %421 = vmatprep.subr.mxu0 0.0
        %422 = vmatpush1.msra.mxu0 0.0
        %423 = vmatprep.subr.mxu0 0.0
        %424 = vmatpush1.msra.mxu0 0.0
        %425 = vmatprep.subr.mxu0 0.0
        %426 = vmatpush1.msra.mxu0 0.0
        %427 = vmatprep.subr.mxu0 0.0
        %428 = vmatpush1.msra.mxu0 0.0
        %429 = vmatprep.subr.mxu0 0.0
        %430 = vmatpush1.msra.mxu0 0.0
        %431 = vmatprep.subr.mxu0 0.0
        %432 = vmatpush1.msra.mxu0 0.0
        %433 = vmatprep.subr.mxu0 0.0
        %434 = vmatpush1.msra.mxu0 0.0
        %435 = vmatprep.subr.mxu0 0.0
        %436 = vmatpush1.msra.mxu0 0.0
        %437 = vmatprep.subr.mxu0 0.0
        %438 = vmatpush1.msra.mxu0 0.0
        %439 = vmatprep.subr.mxu0 0.0
        %440 = vmatpush1.msra.mxu0 0.0
        %441 = vmatprep.subr.mxu0 0.0
        %442 = vmatpush1.msra.mxu0 0.0
        %443 = vmatprep.subr.mxu0 0.0
        %444 = vmatpush1.msra.mxu0 0.0
        %445 = vmatprep.subr.mxu0 0.0
        %446 = vmatpush1.msra.mxu0 0.0
        %447 = vmatprep.subr.mxu0 0.0
        %448 = vmatpush1.msra.mxu0 0.0
        %449 = vmatprep.subr.mxu0 0.0
        %450 = vmatpush1.msra.mxu0 0.0
        %451 = vmatprep.subr.mxu0 0.0
        %v452 = vand.u32 %v190, 4294901760
        %453 = vmatpush1.msra.mxu0 %v452
        %454 = vmatprep.subr.mxu0 0.0
        %455 = vmatpush2.msra.mxu0 0.0
        %456 = vmatprep.subr.mxu0 0.0
        %457 = vmatpush2.msra.mxu0 0.0
        %458 = vmatprep.subr.mxu0 0.0
        %459 = vmatpush2.msra.mxu0 0.0
        %460 = vmatprep.subr.mxu0 0.0
        %461 = vmatpush2.msra.mxu0 0.0
        %462 = vmatprep.subr.mxu0 0.0
        %463 = vmatpush2.msra.mxu0 0.0
        %464 = vmatprep.subr.mxu0 0.0
        %465 = vmatpush2.msra.mxu0 0.0
        %466 = vmatprep.subr.mxu0 0.0
        %467 = vmatpush2.msra.mxu0 0.0
        %468 = vmatprep.subr.mxu0 0.0
        %469 = vmatpush2.msra.mxu0 0.0
        %470 = vmatprep.subr.mxu0 0.0
        %471 = vmatpush2.msra.mxu0 0.0
        %472 = vmatprep.subr.mxu0 0.0
        %473 = vmatpush2.msra.mxu0 0.0
        %474 = vmatprep.subr.mxu0 0.0
        %475 = vmatpush2.msra.mxu0 0.0
        %476 = vmatprep.subr.mxu0 0.0
        %477 = vmatpush2.msra.mxu0 0.0
        %478 = vmatprep.subr.mxu0 0.0
        %479 = vmatpush2.msra.mxu0 0.0
        %480 = vmatprep.subr.mxu0 0.0
        %481 = vmatpush2.msra.mxu0 0.0
        %482 = vmatprep.subr.mxu0 0.0
        %483 = vmatpush2.msra.mxu0 0.0
        %484 = vmatprep.subr.mxu0 0.0
        %485 = vmatpush2.msra.mxu0 0.0
        %486 = vmatprep.mubr.f32.mxu0 0.0
        %v487 = vand.u32 %v193, 4294901760
        %v488 = vsub.f32 %v193, %v487
        %v489 = vand.u32 %v488, 4294901760
        %490 = vmatmul.mubr.f32.gmra.mxu0 %v489
        %v491 = vpop.f32.mrf.mxu0
        %v492 = vadd.f32 %v418, %v491
        %v493 = vpop.f32.mrf.mxu0
        %494 = vdwg.mxu0
        %495 = vmatprep.subr.mxu0 0.0
        %496 = vmatpush1.msra.mxu0 0.0
        %497 = vmatprep.subr.mxu0 0.0
        %498 = vmatpush1.msra.mxu0 0.0
        %499 = vmatprep.subr.mxu0 0.0
        %500 = vmatpush1.msra.mxu0 0.0
        %501 = vmatprep.subr.mxu0 0.0
        %502 = vmatpush1.msra.mxu0 0.0
        %503 = vmatprep.subr.mxu0 0.0
        %504 = vmatpush1.msra.mxu0 0.0
        %505 = vmatprep.subr.mxu0 0.0
        %506 = vmatpush1.msra.mxu0 0.0
        %507 = vmatprep.subr.mxu0 0.0
        %508 = vmatpush1.msra.mxu0 0.0
        %509 = vmatprep.subr.mxu0 0.0
        %510 = vmatpush1.msra.mxu0 0.0
        %511 = vmatprep.subr.mxu0 0.0
        %512 = vmatpush1.msra.mxu0 0.0
        %513 = vmatprep.subr.mxu0 0.0
        %514 = vmatpush1.msra.mxu0 0.0
        %515 = vmatprep.subr.mxu0 0.0
        %516 = vmatpush1.msra.mxu0 0.0
        %517 = vmatprep.subr.mxu0 0.0
        %518 = vmatpush1.msra.mxu0 0.0
        %519 = vmatprep.subr.mxu0 0.0
        %520 = vmatpush1.msra.mxu0 0.0
        %521 = vmatprep.subr.mxu0 0.0
        %522 = vmatpush1.msra.mxu0 0.0
        %523 = vmatprep.subr.mxu0 0.0
        %524 = vmatpush1.msra.mxu0 0.0
        %525 = vmatprep.subr.mxu0 0.0
        %v526 = vand.u32 %v190, 4294901760
        %v527 = vsub.f32 %v190, %v526
        %v528 = vand.u32 %v527, 4294901760
        %529 = vmatpush1.msra.mxu0 %v528
        %530 = vmatprep.subr.mxu0 0.0
        %531 = vmatpush2.msra.mxu0 0.0
        %532 = vmatprep.subr.mxu0 0.0
        %533 = vmatpush2.msra.mxu0 0.0
        %534 = vmatprep.subr.mxu0 0.0
        %535 = vmatpush2.msra.mxu0 0.0
        %536 = vmatprep.subr.mxu0 0.0
        %537 = vmatpush2.msra.mxu0 0.0
        %538 = vmatprep.subr.mxu0 0.0
        %539 = vmatpush2.msra.mxu0 0.0
        %540 = vmatprep.subr.mxu0 0.0
        %541 = vmatpush2.msra.mxu0 0.0
        %542 = vmatprep.subr.mxu0 0.0
        %543 = vmatpush2.msra.mxu0 0.0
        %544 = vmatprep.subr.mxu0 0.0
        %545 = vmatpush2.msra.mxu0 0.0
        %546 = vmatprep.subr.mxu0 0.0
        %547 = vmatpush2.msra.mxu0 0.0
        %548 = vmatprep.subr.mxu0 0.0
        %549 = vmatpush2.msra.mxu0 0.0
        %550 = vmatprep.subr.mxu0 0.0
        %551 = vmatpush2.msra.mxu0 0.0
        %552 = vmatprep.subr.mxu0 0.0
        %553 = vmatpush2.msra.mxu0 0.0
        %554 = vmatprep.subr.mxu0 0.0
        %555 = vmatpush2.msra.mxu0 0.0
        %556 = vmatprep.subr.mxu0 0.0
        %557 = vmatpush2.msra.mxu0 0.0
        %558 = vmatprep.subr.mxu0 0.0
        %559 = vmatpush2.msra.mxu0 0.0
        %560 = vmatprep.subr.mxu0 0.0
        %561 = vmatpush2.msra.mxu0 0.0
        %562 = vmatprep.mubr.f32.mxu0 0.0
        %v563 = vand.u32 %v193, 4294901760
        %564 = vmatmul.mubr.f32.gmra.mxu0 %v563
        %v565 = vpop.f32.mrf.mxu0
        %v566 = vadd.f32 %v492, %v565
        %v567 = vpop.f32.mrf.mxu0
        %568 = vdwg.mxu0
        %569 = vmatprep.subr.mxu0 0.0
        %570 = vmatpush1.msra.mxu0 0.0
        %571 = vmatprep.subr.mxu0 0.0
        %572 = vmatpush1.msra.mxu0 0.0
        %573 = vmatprep.subr.mxu0 0.0
        %574 = vmatpush1.msra.mxu0 0.0
        %575 = vmatprep.subr.mxu0 0.0
        %576 = vmatpush1.msra.mxu0 0.0
        %577 = vmatprep.subr.mxu0 0.0
        %578 = vmatpush1.msra.mxu0 0.0
        %579 = vmatprep.subr.mxu0 0.0
        %580 = vmatpush1.msra.mxu0 0.0
        %581 = vmatprep.subr.mxu0 0.0
        %582 = vmatpush1.msra.mxu0 0.0
        %583 = vmatprep.subr.mxu0 0.0
        %584 = vmatpush1.msra.mxu0 0.0
        %585 = vmatprep.subr.mxu0 0.0
        %586 = vmatpush1.msra.mxu0 0.0
        %587 = vmatprep.subr.mxu0 0.0
        %588 = vmatpush1.msra.mxu0 0.0
        %589 = vmatprep.subr.mxu0 0.0
        %590 = vmatpush1.msra.mxu0 0.0
        %591 = vmatprep.subr.mxu0 0.0
        %592 = vmatpush1.msra.mxu0 0.0
        %593 = vmatprep.subr.mxu0 0.0
        %594 = vmatpush1.msra.mxu0 0.0
        %595 = vmatprep.subr.mxu0 0.0
        %596 = vmatpush1.msra.mxu0 0.0
        %597 = vmatprep.subr.mxu0 0.0
        %598 = vmatpush1.msra.mxu0 0.0
        %599 = vmatprep.subr.mxu0 0.0
        %v600 = vand.u32 %v190, 4294901760
        %601 = vmatpush1.msra.mxu0 %v600
        %602 = vmatprep.subr.mxu0 0.0
        %603 = vmatpush2.msra.mxu0 0.0
        %604 = vmatprep.subr.mxu0 0.0
        %605 = vmatpush2.msra.mxu0 0.0
        %606 = vmatprep.subr.mxu0 0.0
        %607 = vmatpush2.msra.mxu0 0.0
        %608 = vmatprep.subr.mxu0 0.0
        %609 = vmatpush2.msra.mxu0 0.0
        %610 = vmatprep.subr.mxu0 0.0
        %611 = vmatpush2.msra.mxu0 0.0
        %612 = vmatprep.subr.mxu0 0.0
        %613 = vmatpush2.msra.mxu0 0.0
        %614 = vmatprep.subr.mxu0 0.0
        %615 = vmatpush2.msra.mxu0 0.0
        %616 = vmatprep.subr.mxu0 0.0
        %617 = vmatpush2.msra.mxu0 0.0
        %618 = vmatprep.subr.mxu0 0.0
        %619 = vmatpush2.msra.mxu0 0.0
        %620 = vmatprep.subr.mxu0 0.0
        %621 = vmatpush2.msra.mxu0 0.0
        %622 = vmatprep.subr.mxu0 0.0
        %623 = vmatpush2.msra.mxu0 0.0
        %624 = vmatprep.subr.mxu0 0.0
        %625 = vmatpush2.msra.mxu0 0.0
        %626 = vmatprep.subr.mxu0 0.0
        %627 = vmatpush2.msra.mxu0 0.0
        %628 = vmatprep.subr.mxu0 0.0
        %629 = vmatpush2.msra.mxu0 0.0
        %630 = vmatprep.subr.mxu0 0.0
        %631 = vmatpush2.msra.mxu0 0.0
        %632 = vmatprep.subr.mxu0 0.0
        %633 = vmatpush2.msra.mxu0 0.0
        %634 = vmatprep.mubr.f32.mxu0 0.0
        %v635 = vand.u32 %v193, 4294901760
        %636 = vmatmul.mubr.f32.gmra.mxu0 %v635
        %v637 = vpop.f32.mrf.mxu0
        %v638 = vadd.f32 %v566, %v637
        %v639 = vpop.f32.mrf.mxu0
        %640 = vdwg.mxu0
        %641 = vst [vmem:[%s188] sm:$0xff] %v638
        %s642 = sand.u32 %s91, 1
        %s643 = scalar_lea.sflag [#allocation4], %s642
        %s644 = sand.u32 %s91, 1
        %s645 = smul.addr %s644, 8
        %s646 = scalar_lea.vmem [#allocation7], %s645
        // Predicated region
        $region37: #{tpu_custom_call.1} parent=27 // pred_check
          %p647 = pneg %p101
        $region38: #{tpu_custom_call.1} parent=27 // pred_check_branch
          %649 = sbr.rel (%p647) target = $region40
        $region39: #{tpu_custom_call.1} parent=27 // pred_region
          %s651 = ssub.s32 128, 128
          %652 = vsyncadd %s643, %s651
          %s653 = sadd.s32 %s25, %s24
          %s654 = smul.addr %s653, 128
          %s655 = scalar_lea.hbm %s2, %s654
          %s657 = sshll.u32 %s646, 4
          %s658 = int_to_ptr.vmem [resolvable:$true] %s657
          %660 = dma.vmem_to_hbm [thread:$0]  %s658, 128, %s655, %s643
        $region40: #{tpu_custom_call.1} parent=27 // pred_fallthru
          _
      $region28: #{tpu_custom_call.1} parent=5 // pred_fallthru
        _
      %p661 = scmp.le.s32.totalorder 2, %s15
      // Predicated region
      $region41: #{tpu_custom_call.1} parent=5 // pred_check
        %p662 = pneg %p661
      $region42: #{tpu_custom_call.1} parent=5 // pred_check_branch
        %664 = sbr.rel (%p662) target = $region44
      $region43: #{tpu_custom_call.1} parent=5 // pred_region
        %s665 = ssub.s32 %s15, 2
        // Predicated region
        $region45: #{tpu_custom_call.1} parent=43 // pred_check
          %p666 = pneg %p107
        $region46: #{tpu_custom_call.1} parent=43 // pred_check_branch
          %668 = sbr.rel (%p666) target = $region48
        $region47: #{tpu_custom_call.1} parent=43 // pred_region
          %s669 = sand.u32 %s92, 1
          %s670 = scalar_lea.sflag [#allocation4], %s669
          %s671 = sand.u32 %s92, 1
          %s672 = smul.addr %s671, 8
          %s673 = scalar_lea.vmem [#allocation7], %s672
          %674 = dma.done %s670, 128
        $region48: #{tpu_custom_call.1} parent=43 // pred_fallthru
          _
      $region44: #{tpu_custom_call.1} parent=5 // pred_fallthru
        _
    $region6: #{tpu_custom_call.1} parent=1 // loop_footer
      %s19 = sadd.s32 1, %s15
    $region7: #{tpu_custom_call.1} parent=1 // loop_footer_branch
      %14 = sbr.rel target = $region3
    $region8: #{tpu_custom_call.1} parent=1 // loop_exit
      _
    %675 = vsyncpa [#allocation3], 1
    %s676 = scalar_lea.sflag [#allocation3], 1
    %677 = vsyncpa %s676, 1
    %678 = vsyncpa [#allocation6], 1
    %s679 = scalar_lea.sflag [#allocation6], 1
    %680 = vsyncpa %s679, 1
    %681 = vsyncpa [#allocation4], 1
    %s682 = scalar_lea.sflag [#allocation4], 1
    %683 = vsyncpa %s682, 1

</llo_original>
